<compile_context>
chip_gen: v7x
topology: tpu7x:2x2x1
jax: 0.10.0
libtpu: 0.0.40
codegen_flags: <defaults>
</compile_context>

<pallas_src>
import functools

import jax
import jax.numpy as jnp
from jax.experimental import pallas as pl
from jax.experimental.pallas import tpu as pltpu

TEMPERATURE = 1.0          # self.temperature
_LANE = 128
_NEG_BIG = -1e30


def _round_up(v, m):
    return (v + m - 1) // m * m


# ---------------------------------------------------------------------------
# Fused kernel: streaming global-average-pool + fc/BN/ReLU + 4 attention heads
# ---------------------------------------------------------------------------
def _fused_kernel(x_ref, fc_w_ref, bn_scale_ref, bn_bias_ref, wcat_ref,
                  bcat_ref, out_ref, acc_ref, *,
                  s_total, s_tile, inv_hw, inv_t, ker_start, ker_num):
    """Each grid step streams one (B, C, s_tile) spatial tile of x (native f32)
    and folds it VALU-only into a lane-wide f32 accumulator.  On the last step
    the mean is finished (single cross-lane reduce) and the whole head runs."""
    j = pl.program_id(0)
    last = pl.num_programs(0) - 1

    @pl.when(j == 0)
    def _init():
        acc_ref[...] = jnp.zeros_like(acc_ref)

    def accumulate(valid_len):
        # Per-slab loads: static slices on the Ref are free and keep the live
        # set to a handful of vregs (no full-tile f32 temporary / spills).
        acc = acc_ref[...]
        for m in range(pl.cdiv(valid_len, _LANE)):          # static unroll
            slab = x_ref[:, :, m * _LANE:(m + 1) * _LANE].astype(jnp.float32)
            n_valid = min(valid_len - m * _LANE, _LANE)       # static int
            if n_valid < _LANE:                               # only the ragged slab
                lane = jax.lax.broadcasted_iota(jnp.int32, slab.shape, 2)
                slab = jnp.where(lane < n_valid, slab, 0.0)
            acc = acc + slab
        acc_ref[...] = acc

    tail_len = s_total % s_tile          # static; > 0 iff the last tile is ragged
    if tail_len == 0:
        accumulate(s_tile)
    else:
        @pl.when(j < last)
        def _full_tile():
            accumulate(s_tile)

        @pl.when(j == last)
        def _ragged_tile():
            accumulate(tail_len)

    @pl.when(j == last)
    def _head():
        # Finish the mean: ONE cross-lane reduce + divide by the TRUE H*W.
        pooled = jnp.sum(acc_ref[...], axis=-1) * inv_hw                 # (B, C)

        # fc (1x1 conv, no bias) + BatchNorm (running stats folded) + ReLU.
        h = jnp.dot(pooled, fc_w_ref[...], preferred_element_type=jnp.float32)
        h = h * bn_scale_ref[...] + bn_bias_ref[...]
        h = jnp.maximum(h, 0.0)                                          # (B, A_pad)

        # All four heads fused into one lane-dense matmul.
        logits = (jnp.dot(h, wcat_ref[...], preferred_element_type=jnp.float32)
                  + bcat_ref[...]) * inv_t                               # (B, N_pad)

        lane = jax.lax.broadcasted_iota(jnp.int32, logits.shape, 1)
        ker_mask = (lane >= ker_start) & (lane < ker_start + ker_num)

        # channel / filter / spatial attentions: sigmoid(logits / T)
        sig = jax.nn.sigmoid(logits)

        # kernel attention: softmax over its own lane segment only
        masked = jnp.where(ker_mask, logits, _NEG_BIG)
        mmax = jnp.max(masked, axis=-1, keepdims=True)
        e = jnp.where(ker_mask, jnp.exp(masked - mmax), 0.0)
        sm = e / jnp.sum(e, axis=-1, keepdims=True)

        out_ref[...] = jnp.where(ker_mask, sm, sig)


# ---------------------------------------------------------------------------
# Wrapper
# ---------------------------------------------------------------------------
def odconv_attention(x, params, kernel_size, kernel_num, *,
                     vmem_budget_bytes=24 * 1024 * 1024):
    """x: (B, C_in, H, W) NCHW, any float dtype (kept native; accumulation is f32).
    Returns the 4 attentions with the PyTorch output shapes."""
    B, C, H, W = x.shape
    S = H * W
    in_planes = params["ch_w"].shape[1]
    out_planes = params["fil_w"].shape[1]
    A = params["fc_w"].shape[1]

    # ---- spatial tile derived from the VMEM budget (double-buffered input),
    #      multiple of 128 lanes, capped to keep the static unroll small ----
    itemsize = x.dtype.itemsize
    s_cap = min(_round_up(S, _LANE), 8192)
    s_fit = max(_LANE,
                (vmem_budget_bytes // (2 * B * C * itemsize)) // _LANE * _LANE)
    s_tile = min(s_cap, s_fit)
    num_s = pl.cdiv(S, s_tile)

    # ---- pad / fuse the tiny head weights once in the wrapper (KBs only) ----
    a_pad = _round_up(A, _LANE)
    n_total = in_planes + out_planes + kernel_size * kernel_size + kernel_num
    n_pad = _round_up(n_total, _LANE)
    ker_start = in_planes + out_planes + kernel_size * kernel_size

    fc_w = jnp.pad(params["fc_w"], ((0, 0), (0, a_pad - A)))             # (C, A_pad)
    bn_scale = jnp.pad(params["bn_scale"], ((0, 0), (0, a_pad - A)))     # (1, A_pad)
    bn_bias = jnp.pad(params["bn_bias"], ((0, 0), (0, a_pad - A)))       # (1, A_pad)
    wcat = jnp.concatenate(
        [params["ch_w"], params["fil_w"], params["sp_w"], params["ker_w"]], axis=1)
    bcat = jnp.concatenate(
        [params["ch_b"], params["fil_b"], params["sp_b"], params["ker_b"]], axis=1)
    wcat = jnp.pad(wcat, ((0, a_pad - A), (0, n_pad - n_total)))         # (A_pad, N_pad)
    bcat = jnp.pad(bcat, ((0, 0), (0, n_pad - n_total)))                 # (1, N_pad)

    # Free reshape (collapses contiguous trailing dims); NO pad, NO dtype cast.
    x3 = x.reshape(B, C, S)

    out = pl.pallas_call(
        functools.partial(_fused_kernel,
                          s_total=S, s_tile=s_tile,
                          inv_hw=1.0 / float(S),
                          inv_t=1.0 / TEMPERATURE,
                          ker_start=ker_start, ker_num=kernel_num),
        out_shape=jax.ShapeDtypeStruct((B, n_pad), jnp.float32),
        grid=(num_s,),
        in_specs=[
            pl.BlockSpec((B, C, s_tile), lambda j: (0, 0, j)),   # streamed input
            pl.BlockSpec((C, a_pad), lambda j: (0, 0)),          # fc weight
            pl.BlockSpec((1, a_pad), lambda j: (0, 0)),          # bn scale
            pl.BlockSpec((1, a_pad), lambda j: (0, 0)),          # bn bias
            pl.BlockSpec((a_pad, n_pad), lambda j: (0, 0)),      # fused head weights
            pl.BlockSpec((1, n_pad), lambda j: (0, 0)),          # fused head biases
        ],
        out_specs=pl.BlockSpec((B, n_pad), lambda j: (0, 0)),
        scratch_shapes=[pltpu.VMEM((B, C, _LANE), jnp.float32)],  # lane-wide f32 acc
        compiler_params=pltpu.CompilerParams(
            dimension_semantics=("arbitrary",),                   # reduction axis
            vmem_limit_bytes=32 * 1024 * 1024),                   # v7x-safe ceiling
    )(x3, fc_w, bn_scale, bn_bias, wcat, bcat)

    ch = out[:, :in_planes]
    fil = out[:, in_planes:in_planes + out_planes]
    sp = out[:, in_planes + out_planes:ker_start]
    ker = out[:, ker_start:ker_start + kernel_num]

    return (ch.reshape(B, in_planes, 1, 1),
            fil.reshape(B, out_planes, 1, 1),
            sp.reshape(B, 1, 1, 1, kernel_size, kernel_size),
            ker.reshape(B, kernel_num, 1, 1, 1, 1))


# ---------------------------------------------------------------------------
# Parameter init matching the PyTorch module's _initialize_weights (eval BN)
# ---------------------------------------------------------------------------
def init_params(key, in_planes, out_planes, kernel_size, kernel_num,
                reduction=0.0625, min_channel=16):
    attn_ch = max(int(in_planes * reduction), min_channel)
    keys = jax.random.split(key, 5)

    def kaiming_t(k, out_ch, in_ch):
        # Conv2d(in_ch, out_ch, 1): kaiming_normal_(mode='fan_out', relu)
        # fan_out = out_ch * 1 * 1  ->  std = sqrt(2 / out_ch).
        std = (2.0 / out_ch) ** 0.5
        w = jax.random.normal(k, (out_ch, in_ch), jnp.float32) * std
        return w.T  # stored as (in_ch, out_ch) for in-kernel matmul

    eps = 1e-5
    return dict(
        fc_w=kaiming_t(keys[0], attn_ch, in_planes),                   # (C_in, A)
        # BN init: gamma=1, beta=0, running_mean=0, running_var=1 (eval mode)
        bn_scale=jnp.full((1, attn_ch), 1.0 / (1.0 + eps) ** 0.5, jnp.float32),
        bn_bias=jnp.zeros((1, attn_ch), jnp.float32),
        ch_w=kaiming_t(keys[1], in_planes, attn_ch),                   # (A, C_in)
        ch_b=jnp.zeros((1, in_planes), jnp.float32),
        fil_w=kaiming_t(keys[2], out_planes, attn_ch),                 # (A, C_out)
        fil_b=jnp.zeros((1, out_planes), jnp.float32),
        sp_w=kaiming_t(keys[3], kernel_size * kernel_size, attn_ch),   # (A, k*k)
        sp_b=jnp.zeros((1, kernel_size * kernel_size), jnp.float32),
        ker_w=kaiming_t(keys[4], kernel_num, attn_ch),                 # (A, K)
        ker_b=jnp.zeros((1, kernel_num), jnp.float32),
    )


def _reference(x, params):
    pooled = jnp.mean(x.astype(jnp.float32), axis=(2, 3))     # (B, C)
    h = pooled @ params["fc_w"]
    h = h * params["bn_scale"] + params["bn_bias"]
    h = jnp.maximum(h, 0.0)

    def head(w, b):
        return (h @ w + b) / TEMPERATURE

    ch = jax.nn.sigmoid(head(params["ch_w"], params["ch_b"]))
    fil = jax.nn.sigmoid(head(params["fil_w"], params["fil_b"]))
    sp = jax.nn.sigmoid(head(params["sp_w"], params["sp_b"]))
    ker = jax.nn.softmax(head(params["ker_w"], params["ker_b"]), axis=-1)
    return ch, fil, sp, ker


def _run_case(key, B, C_in, H, W, out_planes, kernel_size, kernel_num, tol=5e-4):
    kx, kp = jax.random.split(key)
    x = jax.random.normal(kx, (B, C_in, H, W), jnp.float32)
    params = init_params(kp, C_in, out_planes, kernel_size, kernel_num)

    outs = odconv_attention(x, params, kernel_size, kernel_num)
    jax.block_until_ready(outs)

    ch, fil, sp, ker = outs
    assert ch.shape == (B, C_in, 1, 1)
    assert fil.shape == (B, out_planes, 1, 1)
    assert sp.shape == (B, 1, 1, 1, kernel_size, kernel_size)
    assert ker.shape == (B, kernel_num, 1, 1, 1, 1)

    r_ch, r_fil, r_sp, r_ker = _reference(x, params)
    assert float(jnp.max(jnp.abs(ch.reshape(B, -1) - r_ch))) < tol
    assert float(jnp.max(jnp.abs(fil.reshape(B, -1) - r_fil))) < tol
    assert float(jnp.max(jnp.abs(sp.reshape(B, -1) - r_sp))) < tol
    assert float(jnp.max(jnp.abs(ker.reshape(B, -1) - r_ker))) < tol


if __name__ == "__main__":
    key = jax.random.PRNGKey(0)
    k1, k2 = jax.random.split(key)

    # Primary small shape consistent with the module (B=2, C_in=4, 16x16).
    _run_case(k1, B=2, C_in=4, H=16, W=16,
              out_planes=8, kernel_size=3, kernel_num=4)

    # Ragged spatial extent (H*W not a multiple of 128) exercises the in-kernel
    # tail mask that replaced the wrapper-side zero padding.
    _run_case(k2, B=2, C_in=3, H=13, W=13,
              out_planes=6, kernel_size=5, kernel_num=2)

    print("KERNEL_OK")
</pallas_src>

<mosaic_0001>
module attributes {stable_mosaic.version = 11 : i64} {
  func.func @_fused_kernel(%arg0: i32, %arg1: memref<2x4x256xf32, #tpu.memory_space<vmem>>, %arg2: memref<4x128xf32, #tpu.memory_space<vmem>>, %arg3: memref<1x128xf32, #tpu.memory_space<vmem>>, %arg4: memref<1x128xf32, #tpu.memory_space<vmem>>, %arg5: memref<128x128xf32, #tpu.memory_space<vmem>>, %arg6: memref<1x128xf32, #tpu.memory_space<vmem>>, %arg7: memref<2x128xf32, #tpu.memory_space<vmem>>, %arg8: memref<2x4x128xf32, #tpu.memory_space<vmem>>) attributes {dimension_semantics = [#tpu.dimension_semantics<arbitrary>], iteration_bounds = array<i64: 1>, scalar_prefetch = 0 : i64, scratch_operands = 1 : i64, tpu.core_type = #tpu.core_type<tc>, window_params = [{transform_indices = @transform_0, window_bounds = array<i64: 2, 4, 256>}, {pipeline_mode = #tpu.pipeline_mode<synchronous>, transform_indices = @transform_1, window_bounds = array<i64: 4, 128>}, {pipeline_mode = #tpu.pipeline_mode<synchronous>, transform_indices = @transform_2, window_bounds = array<i64: 1, 128>}, {pipeline_mode = #tpu.pipeline_mode<synchronous>, transform_indices = @transform_3, window_bounds = array<i64: 1, 128>}, {pipeline_mode = #tpu.pipeline_mode<synchronous>, transform_indices = @transform_4, window_bounds = array<i64: 128, 128>}, {pipeline_mode = #tpu.pipeline_mode<synchronous>, transform_indices = @transform_5, window_bounds = array<i64: 1, 128>}, {pipeline_mode = #tpu.pipeline_mode<synchronous>, transform_indices = @transform_6, window_bounds = array<i64: 2, 128>}]} {
    %c0_i32 = arith.constant 0 : i32
    %0 = arith.cmpi eq, %arg0, %c0_i32 : i32
    %1 = arith.extui %0 : i1 to i32
    %c0_i32_0 = arith.constant 0 : i32
    %2 = arith.cmpi ne, %1, %c0_i32_0 : i32
    scf.if %2 {
      %cst = arith.constant 0.000000e+00 : f32
      %12 = vector.broadcast %cst : f32 to vector<2x4x128xf32>
      %c0_13 = arith.constant 0 : index
      %c0_14 = arith.constant 0 : index
      %c0_15 = arith.constant 0 : index
      %13 = vector.load %arg8[%c0_13, %c0_14, %c0_15] : memref<2x4x128xf32, #tpu.memory_space<vmem>>, vector<2x4x128xf32>
      tpu.vector_store %arg8[%c0_13, %c0_14, %c0_15], %12 {strides = array<i32>} : memref<2x4x128xf32, #tpu.memory_space<vmem>>, vector<2x4x128xf32>,
    } else {
    }
    %c0 = arith.constant 0 : index
    %c0_1 = arith.constant 0 : index
    %c0_2 = arith.constant 0 : index
    %3 = vector.load %arg8[%c0, %c0_1, %c0_2] : memref<2x4x128xf32, #tpu.memory_space<vmem>>, vector<2x4x128xf32>
    %c0_3 = arith.constant 0 : index
    %c0_4 = arith.constant 0 : index
    %c0_5 = arith.constant 0 : index
    %4 = vector.load %arg1[%c0_3, %c0_4, %c0_5] : memref<2x4x256xf32, #tpu.memory_space<vmem>>, vector<2x4x128xf32>
    %5 = arith.addf %3, %4 : vector<2x4x128xf32>
    %c0_6 = arith.constant 0 : index
    %c0_7 = arith.constant 0 : index
    %c128 = arith.constant 128 : index
    %6 = vector.load %arg1[%c0_6, %c0_7, %c128] : memref<2x4x256xf32, #tpu.memory_space<vmem>>, vector<2x4x128xf32>
    %7 = arith.addf %5, %6 : vector<2x4x128xf32>
    %c0_8 = arith.constant 0 : index
    %c0_9 = arith.constant 0 : index
    %c0_10 = arith.constant 0 : index
    %8 = vector.load %arg8[%c0_8, %c0_9, %c0_10] : memref<2x4x128xf32, #tpu.memory_space<vmem>>, vector<2x4x128xf32>
    tpu.vector_store %arg8[%c0_8, %c0_9, %c0_10], %7 {strides = array<i32>} : memref<2x4x128xf32, #tpu.memory_space<vmem>>, vector<2x4x128xf32>,
    %c0_i32_11 = arith.constant 0 : i32
    %9 = arith.cmpi eq, %arg0, %c0_i32_11 : i32
    %10 = arith.extui %9 : i1 to i32
    %c0_i32_12 = arith.constant 0 : i32
    %11 = arith.cmpi ne, %10, %c0_i32_12 : i32
    scf.if %11 {
      %c0_13 = arith.constant 0 : index
      %c0_14 = arith.constant 0 : index
      %c0_15 = arith.constant 0 : index
      %12 = vector.load %arg8[%c0_13, %c0_14, %c0_15] : memref<2x4x128xf32, #tpu.memory_space<vmem>>, vector<2x4x128xf32>
      %cst = arith.constant dense<0.000000e+00> : vector<2x4xf32>
      %13 = vector.multi_reduction <add>, %12, %cst [2] : vector<2x4x128xf32> to vector<2x4xf32>
      %cst_16 = arith.constant 3.906250e-03 : f32
      %14 = vector.broadcast %cst_16 : f32 to vector<2x4xf32>
      %15 = arith.mulf %13, %14 : vector<2x4xf32>
      %c0_17 = arith.constant 0 : index
      %c0_18 = arith.constant 0 : index
      %16 = vector.load %arg2[%c0_17, %c0_18] : memref<4x128xf32, #tpu.memory_space<vmem>>, vector<4x128xf32>
      %cst_19 = arith.constant dense<0.000000e+00> : vector<2x128xf32>
      %17 = tpu.matmul %15, %16, %cst_19 {dimension_numbers = #tpu.dot_dimension_numbers<[1], [0], [0], [1], [0, 0, 1, 1], [], []>} : vector<2x4xf32>, vector<4x128xf32>, vector<2x128xf32> -> vector<2x128xf32>
      %c0_20 = arith.constant 0 : index
      %c0_21 = arith.constant 0 : index
      %18 = vector.load %arg3[%c0_20, %c0_21] : memref<1x128xf32, #tpu.memory_space<vmem>>, vector<1x128xf32>
      %19 = vector.broadcast %18 : vector<1x128xf32> to vector<2x128xf32>
      %20 = arith.mulf %17, %19 : vector<2x128xf32>
      %c0_22 = arith.constant 0 : index
      %c0_23 = arith.constant 0 : index
      %21 = vector.load %arg4[%c0_22, %c0_23] : memref<1x128xf32, #tpu.memory_space<vmem>>, vector<1x128xf32>
      %22 = vector.broadcast %21 : vector<1x128xf32> to vector<2x128xf32>
      %23 = arith.addf %20, %22 : vector<2x128xf32>
      %cst_24 = arith.constant 0.000000e+00 : f32
      %24 = vector.broadcast %cst_24 : f32 to vector<2x128xf32>
      %25 = arith.maximumf %23, %24 : vector<2x128xf32>
      %c0_25 = arith.constant 0 : index
      %c0_26 = arith.constant 0 : index
      %26 = vector.load %arg5[%c0_25, %c0_26] : memref<128x128xf32, #tpu.memory_space<vmem>>, vector<128x128xf32>
      %cst_27 = arith.constant dense<0.000000e+00> : vector<2x128xf32>
      %27 = tpu.matmul %25, %26, %cst_27 {dimension_numbers = #tpu.dot_dimension_numbers<[1], [0], [0], [1], [0, 0, 1, 1], [], []>} : vector<2x128xf32>, vector<128x128xf32>, vector<2x128xf32> -> vector<2x128xf32>
      %c0_28 = arith.constant 0 : index
      %c0_29 = arith.constant 0 : index
      %28 = vector.load %arg6[%c0_28, %c0_29] : memref<1x128xf32, #tpu.memory_space<vmem>>, vector<1x128xf32>
      %29 = vector.broadcast %28 : vector<1x128xf32> to vector<2x128xf32>
      %30 = arith.addf %27, %29 : vector<2x128xf32>
      %cst_30 = arith.constant 1.000000e+00 : f32
      %31 = vector.broadcast %cst_30 : f32 to vector<2x128xf32>
      %32 = arith.mulf %30, %31 : vector<2x128xf32>
      %33 = tpu.iota {dimensions = array<i32: 1>} : vector<2x128xi32>
      %c21_i32 = arith.constant 21 : i32
      %34 = vector.broadcast %c21_i32 : i32 to vector<2x128xi32>
      %35 = arith.cmpi sge, %33, %34 : vector<2x128xi32>
      %c25_i32 = arith.constant 25 : i32
      %36 = vector.broadcast %c25_i32 : i32 to vector<2x128xi32>
      %37 = arith.cmpi slt, %33, %36 : vector<2x128xi32>
      %38 = arith.andi %35, %37 : vector<2x128xi1>
      %39 = arith.negf %32 : vector<2x128xf32>
      %40 = math.exp %39 : vector<2x128xf32>
      %cst_31 = arith.constant 1.000000e+00 : f32
      %41 = vector.broadcast %cst_31 : f32 to vector<2x128xf32>
      %42 = arith.addf %41, %40 : vector<2x128xf32>
      %43 = arith.divf %41, %42 : vector<2x128xf32>
      %cst_32 = arith.constant -1.000000e+30 : f32
      %44 = vector.broadcast %cst_32 : f32 to vector<2x128xf32>
      %45 = arith.select %38, %32, %44 : vector<2x128xi1>, vector<2x128xf32>
      %cst_33 = arith.constant dense<0xFF800000> : vector<2xf32>
      %46 = vector.multi_reduction <maximumf>, %45, %cst_33 [1] : vector<2x128xf32> to vector<2xf32>
      %47 = vector.shape_cast %46 : vector<2xf32> to vector<2x1xf32>
      %48 = vector.broadcast %47 : vector<2x1xf32> to vector<2x128xf32>
      %49 = arith.subf %45, %48 : vector<2x128xf32>
      %50 = math.exp %49 : vector<2x128xf32>
      %cst_34 = arith.constant 0.000000e+00 : f32
      %51 = vector.broadcast %cst_34 : f32 to vector<2x128xf32>
      %52 = arith.select %38, %50, %51 : vector<2x128xi1>, vector<2x128xf32>
      %cst_35 = arith.constant dense<0.000000e+00> : vector<2xf32>
      %53 = vector.multi_reduction <add>, %52, %cst_35 [1] : vector<2x128xf32> to vector<2xf32>
      %54 = vector.shape_cast %53 : vector<2xf32> to vector<2x1xf32>
      %55 = vector.broadcast %54 : vector<2x1xf32> to vector<2x128xf32>
      %56 = arith.divf %52, %55 : vector<2x128xf32>
      %57 = arith.select %38, %56, %43 : vector<2x128xi1>, vector<2x128xf32>
      %c0_36 = arith.constant 0 : index
      %c0_37 = arith.constant 0 : index
      %58 = vector.load %arg7[%c0_36, %c0_37] : memref<2x128xf32, #tpu.memory_space<vmem>>, vector<2x128xf32>
      tpu.vector_store %arg7[%c0_36, %c0_37], %57 {strides = array<i32>} : memref<2x128xf32, #tpu.memory_space<vmem>>, vector<2x128xf32>,
    } else {
    }
    return
  }
  func.func @transform_0(%arg0: i32) -> (i32, i32, i32) {
    %c0_i32 = arith.constant 0 : i32
    %c0_i32_0 = arith.constant 0 : i32
    %c0_i32_1 = arith.constant 0 : i32
    return %c0_i32, %c0_i32_0, %arg0 : i32, i32, i32
  }
  func.func @transform_1(%arg0: i32) -> (i32, i32) {
    %c0_i32 = arith.constant 0 : i32
    %c0_i32_0 = arith.constant 0 : i32
    %c0_i32_1 = arith.constant 0 : i32
    return %c0_i32, %c0_i32_0 : i32, i32
  }
  func.func @transform_2(%arg0: i32) -> (i32, i32) {
    %c0_i32 = arith.constant 0 : i32
    %c0_i32_0 = arith.constant 0 : i32
    %c0_i32_1 = arith.constant 0 : i32
    return %c0_i32, %c0_i32_0 : i32, i32
  }
  func.func @transform_3(%arg0: i32) -> (i32, i32) {
    %c0_i32 = arith.constant 0 : i32
    %c0_i32_0 = arith.constant 0 : i32
    %c0_i32_1 = arith.constant 0 : i32
    return %c0_i32, %c0_i32_0 : i32, i32
  }
  func.func @transform_4(%arg0: i32) -> (i32, i32) {
    %c0_i32 = arith.constant 0 : i32
    %c0_i32_0 = arith.constant 0 : i32
    %c0_i32_1 = arith.constant 0 : i32
    return %c0_i32, %c0_i32_0 : i32, i32
  }
  func.func @transform_5(%arg0: i32) -> (i32, i32) {
    %c0_i32 = arith.constant 0 : i32
    %c0_i32_0 = arith.constant 0 : i32
    %c0_i32_1 = arith.constant 0 : i32
    return %c0_i32, %c0_i32_0 : i32, i32
  }
  func.func @transform_6(%arg0: i32) -> (i32, i32) {
    %c0_i32 = arith.constant 0 : i32
    %c0_i32_0 = arith.constant 0 : i32
    %c0_i32_1 = arith.constant 0 : i32
    return %c0_i32, %c0_i32_0 : i32, i32
  }
}

</mosaic_0001>

<llo_original>
// kernel: tpu_custom_call.1
$region0: #{tpu_custom_call.1}
  #allocation0 [shape = 'u32[]', space=smem, size = 0x4, offset = 0x4, fixed_abs, tag = 'smem constant byte address 0x4 - core index']
  #allocation1 [shape = 'u32[144,128]{1,0:T(1,128)}', space=vmem, size = 0x12000, scoped, tag = 'internal scratch']
  #allocation2 [shape = 'f32[2,4,128]{2,1,0:T(4,128)}', space=vmem, size = 0x1000, scoped, tag = 'scratch operand']
  %s0 = inlined_call_operand.hbm [shape: f32[2,4,256], index: 0, kind: input, shape index: {}]
  %s1 = inlined_call_operand.hbm [shape: f32[4,128], index: 1, kind: input, shape index: {}]
  %s2 = inlined_call_operand.vmem [shape: f32[1,128], index: 2, kind: input, shape index: {}]
  %s3 = inlined_call_operand.vmem [shape: f32[1,128], index: 3, kind: input, shape index: {}]
  %s4 = inlined_call_operand.hbm [shape: f32[128,128], index: 4, kind: input, shape index: {}]
  %s5 = inlined_call_operand.vmem [shape: f32[1,128], index: 5, kind: input, shape index: {}]
  %s6 = inlined_call_operand.hbm [shape: f32[2,128], index: 6, kind: output, shape index: {}]
  %s7 = sld [smem:[#allocation0]]
  $region54: #{tpu_custom_call.1} parent=0
    _
  %s9 = ssub.s32 1, %s7
  %s10 = scalar_select 0, %s9, %s7
  $region1: #{tpu_custom_call.1} parent=0
    #allocation3 [shape = 'u8[8192]{0}', space=vmem, size = 0x2000, scoped, tag = 'input window, operand 0, single buffered']
    #allocation4 [shape = 's32[1]{0}', space=sflag, size = 0x4, scoped, tag = 'scoped memory for tpu_custom_call.1']
    #allocation5 [shape = 's32[1]{0}', space=sflag, size = 0x4, scoped, tag = 'scoped memory for tpu_custom_call.1']
    #allocation6 [shape = 'u8[2048]{0}', space=vmem, size = 0x800, scoped, tag = 'input window, operand 1, single buffered']
    #allocation7 [shape = 's32[1]{0}', space=sflag, size = 0x4, scoped, tag = 'scoped memory for tpu_custom_call.1']
    #allocation8 [shape = 'u8[65536]{0}', space=vmem, size = 0x10000, scoped, tag = 'input window, operand 4, single buffered']
    #allocation9 [shape = 'u8[1024]{0}', space=vmem, size = 0x400, scoped, tag = 'output window, operand 0, single buffered']
    %11 = vsyncpa [#allocation4], 0
    %12 = vsyncpa [#allocation7], 0
    %13 = vsyncpa [#allocation5], 0
    // Predicated region
    $region2: #{tpu_custom_call.1} parent=1 // pred_check
      _
    $region3: #{tpu_custom_call.1} parent=1 // pred_check_branch
      %15 = sbr.rel (0) target = $region5
    $region4: #{tpu_custom_call.1} parent=1 // pred_region
      %s17 = ssub.s32 256, 256
      %18 = vsyncadd [#allocation4], %s17
      %s19 = sshll.u32 [#allocation3], 4
      %s20 = int_to_ptr.vmem [resolvable:$true] %s19
      %25 = dma.hbm_to_vmem [thread:$0]  %s0, 256, %s20, [#allocation4], 128, 128, 8
    $region5: #{tpu_custom_call.1} parent=1 // pred_fallthru
      _
    // Predicated region
    $region6: #{tpu_custom_call.1} parent=1 // pred_check
      _
    $region7: #{tpu_custom_call.1} parent=1 // pred_check_branch
      %27 = sbr.rel (0) target = $region9
    $region8: #{tpu_custom_call.1} parent=1 // pred_region
      %s29 = ssub.s32 64, 64
      %30 = vsyncadd [#allocation7], %s29
      %s32 = sshll.u32 [#allocation6], 4
      %s33 = int_to_ptr.vmem [resolvable:$true] %s32
      %35 = dma.hbm_to_vmem [thread:$0]  %s1, 64, %s33, [#allocation7]
    $region9: #{tpu_custom_call.1} parent=1 // pred_fallthru
      _
    // Predicated region
    $region10: #{tpu_custom_call.1} parent=1 // pred_check
      _
    $region11: #{tpu_custom_call.1} parent=1 // pred_check_branch
      %37 = sbr.rel (0) target = $region13
    $region12: #{tpu_custom_call.1} parent=1 // pred_region
      _
    $region13: #{tpu_custom_call.1} parent=1 // pred_fallthru
      _
    // Predicated region
    $region14: #{tpu_custom_call.1} parent=1 // pred_check
      _
    $region15: #{tpu_custom_call.1} parent=1 // pred_check_branch
      %39 = sbr.rel (0) target = $region17
    $region16: #{tpu_custom_call.1} parent=1 // pred_region
      _
    $region17: #{tpu_custom_call.1} parent=1 // pred_fallthru
      _
    // Predicated region
    $region18: #{tpu_custom_call.1} parent=1 // pred_check
      _
    $region19: #{tpu_custom_call.1} parent=1 // pred_check_branch
      %41 = sbr.rel (0) target = $region21
    $region20: #{tpu_custom_call.1} parent=1 // pred_region
      %s43 = ssub.s32 2048, 2048
      %44 = vsyncadd [#allocation7], %s43
      %s45 = sshll.u32 [#allocation8], 4
      %s46 = int_to_ptr.vmem [resolvable:$true] %s45
      %51 = dma.hbm_to_vmem [thread:$0]  %s4, 2048, %s46, [#allocation7], 128, 128, 8
    $region21: #{tpu_custom_call.1} parent=1 // pred_fallthru
      _
    // Predicated region
    $region22: #{tpu_custom_call.1} parent=1 // pred_check
      _
    $region23: #{tpu_custom_call.1} parent=1 // pred_check_branch
      %53 = sbr.rel (0) target = $region25
    $region24: #{tpu_custom_call.1} parent=1 // pred_region
      _
    $region25: #{tpu_custom_call.1} parent=1 // pred_fallthru
      _
    // Predicated region
    $region26: #{tpu_custom_call.1} parent=1 // pred_check
      _
    $region27: #{tpu_custom_call.1} parent=1 // pred_check_branch
      %55 = sbr.rel (0) target = $region29
    $region28: #{tpu_custom_call.1} parent=1 // pred_region
      %56 = dma.done [#allocation4], 256
    $region29: #{tpu_custom_call.1} parent=1 // pred_fallthru
      _
    // Predicated region
    $region30: #{tpu_custom_call.1} parent=1 // pred_check
      _
    $region31: #{tpu_custom_call.1} parent=1 // pred_check_branch
      %58 = sbr.rel (0) target = $region33
    $region32: #{tpu_custom_call.1} parent=1 // pred_region
      %59 = dma.done [#allocation7], 64
    $region33: #{tpu_custom_call.1} parent=1 // pred_fallthru
      _
    // Predicated region
    $region34: #{tpu_custom_call.1} parent=1 // pred_check
      _
    $region35: #{tpu_custom_call.1} parent=1 // pred_check_branch
      %61 = sbr.rel (0) target = $region37
    $region36: #{tpu_custom_call.1} parent=1 // pred_region
      %62 = dma.done [#allocation7], 2048
    $region37: #{tpu_custom_call.1} parent=1 // pred_fallthru
      _
    %p63 = scmp.eq.s32.totalorder 0, 0
    // Predicated region
    $region38: #{tpu_custom_call.1} parent=1 // pred_check
      %p64 = pneg %p63
    $region39: #{tpu_custom_call.1} parent=1 // pred_check_branch
      %66 = sbr.rel (%p64) target = $region41
    $region40: #{tpu_custom_call.1} parent=1 // pred_region
      %67 = vst [vmem:[#allocation2] sm:$0xf] 0.0
      %68 = vst [vmem:[#allocation2 + $0x4] sm:$0xf] 0.0
    $region41: #{tpu_custom_call.1} parent=1 // pred_fallthru
      _
    %v69 = vld [vmem:[#allocation2] sm:$0xf]
    %v70 = vld [vmem:[#allocation2 + $0x4] sm:$0xf]
    %v71 = vld [vmem:[#allocation3] sm:$0xf]
    %v72 = vld [vmem:[#allocation3 + $0x8] sm:$0xf]
    %v73 = vadd.f32 %v69, %v71
    %v74 = vadd.f32 %v70, %v72
    %v75 = vld [vmem:[#allocation3 + $0x4] sm:$0xf]
    %v76 = vld [vmem:[#allocation3 + $0xc] sm:$0xf]
    %v77 = vadd.f32 %v73, %v75
    %v78 = vadd.f32 %v74, %v76
    %79 = vst [vmem:[#allocation2] sm:$0xf] %v77
    %80 = vst [vmem:[#allocation2 + $0x4] sm:$0xf] %v78
    // Predicated region
    $region42: #{tpu_custom_call.1} parent=1 // pred_check
      %p81 = pneg %p63
    $region43: #{tpu_custom_call.1} parent=1 // pred_check_branch
      %83 = sbr.rel (%p81) target = $region45
    $region44: #{tpu_custom_call.1} parent=1 // pred_region
      %v84 = vld [vmem:[#allocation2] sm:$0xf]
      %v85 = vld [vmem:[#allocation2 + $0x4] sm:$0xf]
      %vm86 = vcmask 1043456
      %v87 = vsel %vm86, %v84, 0.0
      %88 = vadd.xlane.f32.xlu0 %v87
      %v89 = vpop.xlane.xlu0 %88
      %v90 = vsel %vm86, %v85, 0.0
      %91 = vadd.xlane.f32.xlu0 %v90
      %v92 = vpop.xlane.xlu0 %91
      %v93 = vmul.f32 %v89, 0.00390625
      %v94 = vmul.f32 %v92, 0.00390625
      %v95 = vld [vmem:[#allocation6] sm:$0xf]
      %v98 = vlaneseq
      %v99 = vand.u32 %v98, 127
      %v100 = vlaneseq
      %v101 = vshrl.u32 %v100, 7
      %v102 = vsub.s32 %v99, %v101
      %v103 = vrot.slane %v93, %v102
      %v104 = vlaneseq
      %v105 = vshrl.u32 %v104, 7
      %v106 = vsub.s32 %v99, %v105
      %v107 = vrot.slane %v94, %v106
      %vm108 = vcmask 1041409
      %v109 = vsel %vm108, %v107, %v103
      %vm110 = vcmask 31744
      %v111 = vsel %vm110, %v109, 0
      %v114 = vsel %vm86, %v95, 0
      %116 = vmatprep.subr.mxu0 0.0
      %117 = vmatpush1.msra.mxu0 %v114
      %118 = vmatprep.subr.mxu0 0.0
      %119 = vmatpush1.msra.mxu0 0.0
      %120 = vmatprep.subr.mxu0 0.0
      %121 = vmatpush1.msra.mxu0 0.0
      %122 = vmatprep.subr.mxu0 0.0
      %123 = vmatpush1.msra.mxu0 0.0
      %124 = vmatprep.subr.mxu0 0.0
      %125 = vmatpush1.msra.mxu0 0.0
      %126 = vmatprep.subr.mxu0 0.0
      %127 = vmatpush1.msra.mxu0 0.0
      %128 = vmatprep.subr.mxu0 0.0
      %129 = vmatpush1.msra.mxu0 0.0
      %130 = vmatprep.subr.mxu0 0.0
      %131 = vmatpush1.msra.mxu0 0.0
      %132 = vmatprep.subr.mxu0 0.0
      %133 = vmatpush1.msra.mxu0 0.0
      %134 = vmatprep.subr.mxu0 0.0
      %135 = vmatpush1.msra.mxu0 0.0
      %136 = vmatprep.subr.mxu0 0.0
      %137 = vmatpush1.msra.mxu0 0.0
      %138 = vmatprep.subr.mxu0 0.0
      %139 = vmatpush1.msra.mxu0 0.0
      %140 = vmatprep.subr.mxu0 0.0
      %141 = vmatpush1.msra.mxu0 0.0
      %142 = vmatprep.subr.mxu0 0.0
      %143 = vmatpush1.msra.mxu0 0.0
      %144 = vmatprep.subr.mxu0 0.0
      %145 = vmatpush1.msra.mxu0 0.0
      %146 = vmatprep.subr.mxu0 0.0
      %147 = vmatpush1.msra.mxu0 0.0
      %148 = vmatprep.subr.mxu0 0.0
      %149 = vmatpush1.msra.mxu0 0.0
      %150 = vmatprep.subr.mxu0 0.0
      %151 = vmatpush1.msra.mxu0 0.0
      %152 = vmatprep.subr.mxu0 0.0
      %153 = vmatpush1.msra.mxu0 0.0
      %154 = vmatprep.subr.mxu0 0.0
      %155 = vmatpush1.msra.mxu0 0.0
      %156 = vmatprep.subr.mxu0 0.0
      %157 = vmatpush1.msra.mxu0 0.0
      %158 = vmatprep.subr.mxu0 0.0
      %159 = vmatpush1.msra.mxu0 0.0
      %160 = vmatprep.subr.mxu0 0.0
      %161 = vmatpush1.msra.mxu0 0.0
      %162 = vmatprep.subr.mxu0 0.0
      %163 = vmatpush1.msra.mxu0 0.0
      %164 = vmatprep.subr.mxu0 0.0
      %165 = vmatpush1.msra.mxu0 0.0
      %166 = vmatprep.subr.mxu0 0.0
      %167 = vmatpush1.msra.mxu0 0.0
      %168 = vmatprep.subr.mxu0 0.0
      %169 = vmatpush1.msra.mxu0 0.0
      %170 = vmatprep.subr.mxu0 0.0
      %171 = vmatpush1.msra.mxu0 0.0
      %172 = vmatprep.subr.mxu0 0.0
      %173 = vmatpush1.msra.mxu0 0.0
      %174 = vmatprep.subr.mxu0 0.0
      %175 = vmatpush1.msra.mxu0 0.0
      %176 = vmatprep.subr.mxu0 0.0
      %177 = vmatpush1.msra.mxu0 0.0
      %178 = vmatprep.subr.mxu0 0.0
      %179 = vmatpush1.msra.mxu0 0.0
      %180 = vmatprep.mubr.f32.mxu0 0.0
      %181 = vmatmul.mubr.f32.gmra.mrb[0].mxu0 %v111
      %v182 = vpop.f32.mrb[0].mxu0
      %v183 = vadd.f32 0.0, %v182
      %v184 = vpop.f32.mrb[0].mxu0
      %185 = vdwg.mxu0
      %v186 = vld [vmem:[%s2] sm:$0x1]
      %v188 = vlaneseq
      %v189 = vshrl.u32 %v188, 7
      %v190 = vsub.s32 0, %v189
      %v191 = vrot.slane %v186, %v190
      %v193 = vmul.f32 %v183, %v191
      %v194 = vld [vmem:[%s3] sm:$0x1]
      %v196 = vlaneseq
      %v197 = vshrl.u32 %v196, 7
      %v198 = vsub.s32 0, %v197
      %v199 = vrot.slane %v194, %v198
      %v201 = vadd.f32 %v193, %v199
      %v202 = vmax.f32 %v201, 0.0
      %v203 = vld [vmem:[#allocation8] sm:$0xff]
      %v204 = vld [vmem:[#allocation8 + $0x8] sm:$0xff]
      %v205 = vld [vmem:[#allocation8 + $0x10] sm:$0xff]
      %v206 = vld [vmem:[#allocation8 + $0x18] sm:$0xff]
      %v207 = vld [vmem:[#allocation8 + $0x20] sm:$0xff]
      %v208 = vld [vmem:[#allocation8 + $0x28] sm:$0xff]
      %v209 = vld [vmem:[#allocation8 + $0x30] sm:$0xff]
      %v210 = vld [vmem:[#allocation8 + $0x38] sm:$0xff]
      %v211 = vld [vmem:[#allocation8 + $0x40] sm:$0xff]
      %v212 = vld [vmem:[#allocation8 + $0x48] sm:$0xff]
      %v213 = vld [vmem:[#allocation8 + $0x50] sm:$0xff]
      %v214 = vld [vmem:[#allocation8 + $0x58] sm:$0xff]
      %v215 = vld [vmem:[#allocation8 + $0x60] sm:$0xff]
      %v216 = vld [vmem:[#allocation8 + $0x68] sm:$0xff]
      %v217 = vld [vmem:[#allocation8 + $0x70] sm:$0xff]
      %v218 = vld [vmem:[#allocation8 + $0x78] sm:$0xff]
      %v219 = vld [vmem:[%s5] sm:$0x1]
      %v221 = vlaneseq
      %v222 = vshrl.u32 %v221, 7
      %v223 = vsub.s32 0, %v222
      %v224 = vrot.slane %v219, %v223
      %226 = vmatprep.subr.mxu0 0.0
      %227 = vmatpush1.msra.mxu0 %v203
      %228 = vmatprep.subr.mxu0 0.0
      %229 = vmatpush1.msra.mxu0 %v204
      %230 = vmatprep.subr.mxu0 0.0
      %231 = vmatpush1.msra.mxu0 %v205
      %232 = vmatprep.subr.mxu0 0.0
      %233 = vmatpush1.msra.mxu0 %v206
      %234 = vmatprep.subr.mxu0 0.0
      %235 = vmatpush1.msra.mxu0 %v207
      %236 = vmatprep.subr.mxu0 0.0
      %237 = vmatpush1.msra.mxu0 %v208
      %238 = vmatprep.subr.mxu0 0.0
      %239 = vmatpush1.msra.mxu0 %v209
      %240 = vmatprep.subr.mxu0 0.0
      %241 = vmatpush1.msra.mxu0 %v210
      %242 = vmatprep.subr.mxu0 0.0
      %243 = vmatpush1.msra.mxu0 %v211
      %244 = vmatprep.subr.mxu0 0.0
      %245 = vmatpush1.msra.mxu0 %v212
      %246 = vmatprep.subr.mxu0 0.0
      %247 = vmatpush1.msra.mxu0 %v213
      %248 = vmatprep.subr.mxu0 0.0
      %249 = vmatpush1.msra.mxu0 %v214
      %250 = vmatprep.subr.mxu0 0.0
      %251 = vmatpush1.msra.mxu0 %v215
      %252 = vmatprep.subr.mxu0 0.0
      %253 = vmatpush1.msra.mxu0 %v216
      %254 = vmatprep.subr.mxu0 0.0
      %255 = vmatpush1.msra.mxu0 %v217
      %256 = vmatprep.subr.mxu0 0.0
      %257 = vmatpush1.msra.mxu0 %v218
      %258 = vmatprep.subr.mxu0 0.0
      %259 = vmatpush1.msra.mxu0 0.0
      %260 = vmatprep.subr.mxu0 0.0
      %261 = vmatpush1.msra.mxu0 0.0
      %262 = vmatprep.subr.mxu0 0.0
      %263 = vmatpush1.msra.mxu0 0.0
      %264 = vmatprep.subr.mxu0 0.0
      %265 = vmatpush1.msra.mxu0 0.0
      %266 = vmatprep.subr.mxu0 0.0
      %267 = vmatpush1.msra.mxu0 0.0
      %268 = vmatprep.subr.mxu0 0.0
      %269 = vmatpush1.msra.mxu0 0.0
      %270 = vmatprep.subr.mxu0 0.0
      %271 = vmatpush1.msra.mxu0 0.0
      %272 = vmatprep.subr.mxu0 0.0
      %273 = vmatpush1.msra.mxu0 0.0
      %274 = vmatprep.subr.mxu0 0.0
      %275 = vmatpush1.msra.mxu0 0.0
      %276 = vmatprep.subr.mxu0 0.0
      %277 = vmatpush1.msra.mxu0 0.0
      %278 = vmatprep.subr.mxu0 0.0
      %279 = vmatpush1.msra.mxu0 0.0
      %280 = vmatprep.subr.mxu0 0.0
      %281 = vmatpush1.msra.mxu0 0.0
      %282 = vmatprep.subr.mxu0 0.0
      %283 = vmatpush1.msra.mxu0 0.0
      %284 = vmatprep.subr.mxu0 0.0
      %285 = vmatpush1.msra.mxu0 0.0
      %286 = vmatprep.subr.mxu0 0.0
      %287 = vmatpush1.msra.mxu0 0.0
      %288 = vmatprep.subr.mxu0 0.0
      %289 = vmatpush1.msra.mxu0 0.0
      %290 = vmatprep.mubr.f32.mxu0 0.0
      %291 = vmatmul.mubr.f32.gmra.mrb[0].mxu0 %v202
      %v292 = vpop.f32.mrb[0].mxu0
      %v293 = vadd.f32 %v224, %v292
      %v294 = vpop.f32.mrb[0].mxu0
      %295 = vdwg.mxu0
      %vm296 = vcmp.ge.s32.totalorder %v99, 21
      %vm297 = vcmp.lt.s32.totalorder %v99, 25
      %vm298 = vmand %vm296, %vm297
      %v299 = vxor.u32 %v293, 2147483648
      %v300 = vmul.f32 %v299, 1.442695
      %v301 = vpow.pop %v300
      %v302 = vadd.f32 %v301, 1.0
      %v303 = vrcp.pop %v302
      %v304 = vmul.f32 1.0, %v303
      %v305 = vsel %vm298, %v293, -1e+30
      %vm306 = vcmask 1041408
      %v307 = vsel %vm306, %v305, -inf
      %308 = vmax.xlane.f32.xlu0 %v307
      %v309 = vpop.xlane.xlu0 %308
      %v310 = vsub.f32 %v305, %v309
      %v311 = vmul.f32 %v310, 1.442695
      %v312 = vpow.pop %v311
      %v313 = vsel %vm298, %v312, 0.0
      %v314 = vsel %vm306, %v313, 0.0
      %315 = vadd.xlane.f32.xlu0 %v314
      %v316 = vpop.xlane.xlu0 %315
      %v317 = vrcp.pop %v316
      %v318 = vmul.f32 %v313, %v317
      %v319 = vsel %vm298, %v318, %v304
      %320 = vst [vmem:[#allocation9] sm:$0x3] %v319
    $region45: #{tpu_custom_call.1} parent=1 // pred_fallthru
      _
    // Predicated region
    $region46: #{tpu_custom_call.1} parent=1 // pred_check
      _
    $region47: #{tpu_custom_call.1} parent=1 // pred_check_branch
      %322 = sbr.rel (0) target = $region49
    $region48: #{tpu_custom_call.1} parent=1 // pred_region
      %s324 = ssub.s32 32, 32
      %325 = vsyncadd [#allocation5], %s324
      %s327 = sshll.u32 [#allocation9], 4
      %s328 = int_to_ptr.vmem [resolvable:$true] %s327
      %330 = dma.vmem_to_hbm [thread:$0]  %s328, 32, %s6, [#allocation5]
    $region49: #{tpu_custom_call.1} parent=1 // pred_fallthru
      _
    // Predicated region
    $region50: #{tpu_custom_call.1} parent=1 // pred_check
      _
    $region51: #{tpu_custom_call.1} parent=1 // pred_check_branch
      %332 = sbr.rel (0) target = $region53
    $region52: #{tpu_custom_call.1} parent=1 // pred_region
      %333 = dma.done [#allocation5], 32
    $region53: #{tpu_custom_call.1} parent=1 // pred_fallthru
      _
    %334 = vsyncpa [#allocation4], 1
    %335 = vsyncpa [#allocation7], 1
    %336 = vsyncpa [#allocation5], 1

</llo_original>
